<compile_context>
chip_gen: v7x
topology: tpu7x:2x2x1
jax: 0.10.0
libtpu: 0.0.40
codegen_flags: <defaults>
</compile_context>

<pallas_src>
import math

import jax
import jax.numpy as jnp
from jax.experimental import pallas as pl
from jax.experimental.pallas import tpu as pltpu


def _linear1_broadcast_kernel(x_ref, w_ref, b_ref, o_ref):
    # group == 1 path.
    # x_ref: (t, 1); w_ref: (1, n_embd); b_ref: (1, n_embd)
    # Pure VPU broadcast multiply-add (never drive the MXU with K=1).
    x = x_ref[...].astype(jnp.float32)
    o_ref[...] = (x * w_ref[...] + b_ref[...]).astype(o_ref.dtype)


def _linear1_grouped_kernel(x_ref, wexp_ref, bexp_ref, o_ref):
    # group > 1 path (lane-dense packed output).
    # x_ref:    (t_g, group)
    # wexp_ref: (group, group * n_embd), block-diagonal: wexp[g, g*n_embd + e] = w[e]
    # bexp_ref: (1, group * n_embd) = tile(b, group)
    # out[r, g*n_embd + e] = x[r, g] * w[e] + b[e]
    x = x_ref[...].astype(jnp.float32)
    o_ref[...] = (
        jnp.dot(x, wexp_ref[...], preferred_element_type=jnp.float32) + bexp_ref[...]
    ).astype(o_ref.dtype)


def _pick_group(n_embd):
    """Rows packed per output row: packed lane width (group*n_embd) is a multiple
    of 128, widened toward 512-1024 lanes, capped at group <= 32 so the
    block-diagonal matmul's redundant K=group FLOPs stay hidden under the
    HBM-writeback roofline."""
    base = 128 // math.gcd(n_embd, 128)
    if base > 32:
        return 1  # awkward n_embd: correct (masked-store) broadcast fallback
    group = base
    while group * 2 <= 32 and group * 2 * n_embd <= 1024:
        group *= 2
    return group


def simple_action_tokenizer(x, weight, bias, *, tile_rows=None, out_dtype=None,
                            use_pallas=None):
    """Continuous SimpleActionTokenizer forward: y = x @ weight.T + bias.

    x:      (..., 1) array (each action is a scalar).
    weight: (n_embd, 1)  -- PyTorch nn.Linear layout.
    bias:   (n_embd,)
    Returns (..., n_embd) in `out_dtype` (default: x.dtype).
    """
    n_embd = weight.shape[0]
    assert weight.shape == (n_embd, 1), weight.shape
    assert bias.shape == (n_embd,), bias.shape
    assert x.shape[-1] == 1, "last dim must be 1 (action scalar)"

    out_dtype = jnp.dtype(out_dtype) if out_dtype is not None else jnp.dtype(x.dtype)
    out_itemsize = out_dtype.itemsize
    w = weight.reshape(n_embd).astype(jnp.float32)
    b = bias.astype(jnp.float32)

    lead_shape = x.shape[:-1]
    x1 = x.reshape(-1)                       # (N,)
    n_rows = x1.shape[0]

    # Small-N fast path: for tiny action batches a standalone kernel is pure
    # launch/DMA latency; a plain broadcast MAD lets XLA fuse into the consumer.
    if use_pallas is None:
        use_pallas = n_rows * n_embd * out_itemsize >= (256 << 10)
    if not use_pallas:
        y = (x1.astype(jnp.float32)[:, None] * w[None, :] + b[None, :]).astype(out_dtype)
        return y.reshape(*lead_shape, n_embd)

    group = _pick_group(n_embd)
    lane_w = group * n_embd
    row_quantum = 8 * group                  # f32 sublane (8) x row packing

    # Pad only to the row quantum (needed for the packing reshape).  The final
    # grid block may be ragged; Pallas masks the partial read/write and the
    # padded tail rows are sliced off below -- no full padded output tile.
    n_pad = pl.cdiv(n_rows, row_quantum) * row_quantum
    if n_pad != n_rows:
        x1 = jnp.pad(x1, (0, n_pad - n_rows))
    rows_g = n_pad // group                  # packed sublane rows (multiple of 8)
    x2 = x1.reshape(rows_g, group)           # contiguous row-major -> layout plumbing only

    # Tile size: target ~4 MiB output blocks per grid step (HBM-writeback bound).
    if tile_rows is None:
        t_g = max(8, (4 << 20) // (lane_w * out_itemsize))
    else:
        t_g = max(8, tile_rows // group)
    t_g = (t_g // 8) * 8

    # v7x megacore: if the output is large, guarantee >= 2 grid steps so the
    # "parallel" row axis actually gives work to both TensorCores.
    if n_rows * n_embd * out_itemsize >= (4 << 20):
        half = pl.cdiv(pl.cdiv(rows_g, 2), 8) * 8
        t_g = min(t_g, half)

    t_g = min(t_g, rows_g)                   # never larger than the data
    grid = (pl.cdiv(rows_g, t_g),)

    if group == 1:
        kernel = _linear1_broadcast_kernel
        w_in = w.reshape(1, n_embd)
        b_in = b.reshape(1, n_embd)
    else:
        kernel = _linear1_grouped_kernel
        # Block-diagonal expanded weight: wexp[g, g*n_embd + e] = w[e].
        w_in = jnp.kron(jnp.eye(group, dtype=jnp.float32), w.reshape(1, n_embd))
        b_in = jnp.tile(b, group).reshape(1, lane_w)

    cost = pl.CostEstimate(
        flops=2 * rows_g * group * lane_w,   # includes block-diagonal redundancy
        transcendentals=0,
        bytes_accessed=(x2.size * x2.dtype.itemsize
                        + w_in.size * 4 + b_in.size * 4
                        + rows_g * lane_w * out_itemsize),
    )

    out = pl.pallas_call(
        kernel,
        out_shape=jax.ShapeDtypeStruct((rows_g, lane_w), out_dtype),
        grid_spec=pltpu.PrefetchScalarGridSpec(
            num_scalar_prefetch=0,
            grid=grid,
            in_specs=[
                pl.BlockSpec((t_g, group), lambda i: (i, 0)),   # packed action rows
                pl.BlockSpec(w_in.shape, lambda i: (0, 0)),     # (expanded) weight
                pl.BlockSpec(b_in.shape, lambda i: (0, 0)),     # (tiled) bias
            ],
            out_specs=pl.BlockSpec((t_g, lane_w), lambda i: (i, 0)),
        ),
        compiler_params=pltpu.CompilerParams(
            dimension_semantics=("parallel",),   # shard row blocks across v7x's 2 TCs
            # v5e/v6e: 128 MiB physical VMEM (16/32 MiB scoped default); v7x: 64 MiB
            # physical.  48 MiB is safe everywhere and >> the ~10-12 MiB footprint.
            vmem_limit_bytes=48 * 1024 * 1024,
        ),
        cost_estimate=cost,
    )(x2, w_in, b_in)

    out = out.reshape(n_pad, n_embd)
    if n_pad != n_rows:
        out = out[:n_rows]
    return out.reshape(*lead_shape, n_embd)


def init_params(key, n_embd, dtype=jnp.float32):
    """PyTorch nn.Linear(1, n_embd)-style init: U(-1/sqrt(fan_in), 1/sqrt(fan_in))."""
    kw, kb = jax.random.split(key)
    bound = 1.0  # fan_in = 1
    weight = jax.random.uniform(kw, (n_embd, 1), dtype, -bound, bound)
    bias = jax.random.uniform(kb, (n_embd,), dtype, -bound, bound)
    return weight, bias


def _reference(x, weight, bias):
    # PyTorch: y = x @ W.T + b with W of shape (n_embd, 1)
    return x @ weight.T + bias


if __name__ == "__main__":
    key = jax.random.PRNGKey(0)
    n_embd = 32
    batch, seq = 2, 8

    k_x, k_p, k_x2 = jax.random.split(key, 3)
    # batch_input_size = (-1, 1): each action is a scalar -> (batch, seq, 1)
    x = jax.random.normal(k_x, (batch, seq, 1), dtype=jnp.float32)
    weight, bias = init_params(k_p, n_embd)
    ref = _reference(x, weight, bias)

    # 1) Small module-consistent shape; force the Pallas path so the kernel runs.
    out = jax.block_until_ready(simple_action_tokenizer(x, weight, bias, use_pallas=True))
    assert out.shape == (batch, seq, n_embd), out.shape
    assert jnp.allclose(out, ref, atol=1e-5, rtol=1e-5), "mismatch (small f32)"

    # 2) bf16 output (halves the HBM writeback that bounds this kernel).
    out_bf16 = jax.block_until_ready(
        simple_action_tokenizer(x, weight, bias, out_dtype=jnp.bfloat16, use_pallas=True))
    assert out_bf16.dtype == jnp.bfloat16
    assert jnp.allclose(out_bf16.astype(jnp.float32), ref, atol=3e-2, rtol=3e-2), "mismatch (bf16)"

    # 3) Larger shape exercising multiple grid steps + the ragged/masked tail block.
    xb = jax.random.normal(k_x2, (3, 2731, 1), dtype=jnp.float32)   # 8193 rows
    out_b = jax.block_until_ready(
        simple_action_tokenizer(xb, weight, bias, tile_rows=2048))
    ref_b = _reference(xb, weight, bias)
    assert out_b.shape == (3, 2731, n_embd), out_b.shape
    assert jnp.allclose(out_b, ref_b, atol=1e-5, rtol=1e-5), "mismatch (ragged multi-tile)"

    print("KERNEL_OK")
</pallas_src>

<mosaic_0001>
module attributes {stable_mosaic.version = 11 : i64} {
  func.func @_linear1_grouped_kernel(%arg0: i32, %arg1: memref<8x32xf32, #tpu.memory_space<vmem>>, %arg2: memref<32x1024xf32, #tpu.memory_space<vmem>>, %arg3: memref<1x1024xf32, #tpu.memory_space<vmem>>, %arg4: memref<8x1024xf32, #tpu.memory_space<vmem>>) attributes {dimension_semantics = [#tpu.dimension_semantics<parallel>], iteration_bounds = array<i64: 1>, scalar_prefetch = 0 : i64, scratch_operands = 0 : i64, tpu.core_type = #tpu.core_type<tc>, window_params = [{transform_indices = @transform_0, window_bounds = array<i64: 8, 32>}, {pipeline_mode = #tpu.pipeline_mode<synchronous>, transform_indices = @transform_1, window_bounds = array<i64: 32, 1024>}, {pipeline_mode = #tpu.pipeline_mode<synchronous>, transform_indices = @transform_2, window_bounds = array<i64: 1, 1024>}, {transform_indices = @transform_3, window_bounds = array<i64: 8, 1024>}]} {
    %c0 = arith.constant 0 : index
    %c0_0 = arith.constant 0 : index
    %0 = vector.load %arg1[%c0, %c0_0] : memref<8x32xf32, #tpu.memory_space<vmem>>, vector<8x32xf32>
    %c0_1 = arith.constant 0 : index
    %c0_2 = arith.constant 0 : index
    %1 = vector.load %arg2[%c0_1, %c0_2] : memref<32x1024xf32, #tpu.memory_space<vmem>>, vector<32x1024xf32>
    %cst = arith.constant dense<0.000000e+00> : vector<8x1024xf32>
    %2 = tpu.matmul %0, %1, %cst {dimension_numbers = #tpu.dot_dimension_numbers<[1], [0], [0], [1], [0, 0, 1, 1], [], []>} : vector<8x32xf32>, vector<32x1024xf32>, vector<8x1024xf32> -> vector<8x1024xf32>
    %c0_3 = arith.constant 0 : index
    %c0_4 = arith.constant 0 : index
    %3 = vector.load %arg3[%c0_3, %c0_4] : memref<1x1024xf32, #tpu.memory_space<vmem>>, vector<1x1024xf32>
    %4 = vector.broadcast %3 : vector<1x1024xf32> to vector<8x1024xf32>
    %5 = arith.addf %2, %4 : vector<8x1024xf32>
    %c0_5 = arith.constant 0 : index
    %c0_6 = arith.constant 0 : index
    %6 = vector.load %arg4[%c0_5, %c0_6] : memref<8x1024xf32, #tpu.memory_space<vmem>>, vector<8x1024xf32>
    tpu.vector_store %arg4[%c0_5, %c0_6], %5 {strides = array<i32>} : memref<8x1024xf32, #tpu.memory_space<vmem>>, vector<8x1024xf32>,
    return
  }
  func.func @transform_0(%arg0: i32) -> (i32, i32) {
    %c0_i32 = arith.constant 0 : i32
    %c0_i32_0 = arith.constant 0 : i32
    return %arg0, %c0_i32 : i32, i32
  }
  func.func @transform_1(%arg0: i32) -> (i32, i32) {
    %c0_i32 = arith.constant 0 : i32
    %c0_i32_0 = arith.constant 0 : i32
    %c0_i32_1 = arith.constant 0 : i32
    return %c0_i32, %c0_i32_0 : i32, i32
  }
  func.func @transform_2(%arg0: i32) -> (i32, i32) {
    %c0_i32 = arith.constant 0 : i32
    %c0_i32_0 = arith.constant 0 : i32
    %c0_i32_1 = arith.constant 0 : i32
    return %c0_i32, %c0_i32_0 : i32, i32
  }
  func.func @transform_3(%arg0: i32) -> (i32, i32) {
    %c0_i32 = arith.constant 0 : i32
    %c0_i32_0 = arith.constant 0 : i32
    return %arg0, %c0_i32 : i32, i32
  }
}

</mosaic_0001>

<llo_original>
// kernel: tpu_custom_call.1
$region0: #{tpu_custom_call.1}
  #allocation0 [shape = 'u32[]', space=smem, size = 0x4, offset = 0x4, fixed_abs, tag = 'smem constant byte address 0x4 - core index']
  #allocation1 [shape = 'u32[144,128]{1,0:T(1,128)}', space=vmem, size = 0x12000, scoped, tag = 'internal scratch']
  %s0 = inlined_call_operand.hbm [shape: f32[8,32], index: 0, kind: input, shape index: {}]
  %s1 = inlined_call_operand.hbm [shape: f32[32,1024], index: 1, kind: input, shape index: {}]
  %s2 = inlined_call_operand.hbm [shape: f32[1,1024], index: 2, kind: input, shape index: {}]
  %s3 = inlined_call_operand.hbm [shape: f32[8,1024], index: 3, kind: output, shape index: {}]
  %s4 = sld [smem:[#allocation0]]
  $region34: #{tpu_custom_call.1} parent=0
    _
  %s6 = ssub.s32 1, %s4
  %s7 = scalar_select 0, %s6, %s4
  $region1: #{tpu_custom_call.1} parent=0
    #allocation2 [shape = 'u8[4096]{0}', space=vmem, size = 0x1000, scoped, tag = 'input window, operand 0, single buffered']
    #allocation3 [shape = 's32[1]{0}', space=sflag, size = 0x4, scoped, tag = 'scoped memory for tpu_custom_call.1']
    #allocation4 [shape = 's32[1]{0}', space=sflag, size = 0x4, scoped, tag = 'scoped memory for tpu_custom_call.1']
    #allocation5 [shape = 'u8[131072]{0}', space=vmem, size = 0x20000, scoped, tag = 'input window, operand 1, single buffered']
    #allocation6 [shape = 's32[1]{0}', space=sflag, size = 0x4, scoped, tag = 'scoped memory for tpu_custom_call.1']
    #allocation7 [shape = 'u8[4096]{0}', space=vmem, size = 0x1000, scoped, tag = 'input window, operand 2, single buffered']
    #allocation8 [shape = 'u8[32768]{0}', space=vmem, size = 0x8000, scoped, tag = 'output window, operand 0, single buffered']
    %8 = vsyncpa [#allocation3], 0
    %9 = vsyncpa [#allocation6], 0
    %10 = vsyncpa [#allocation4], 0
    // Predicated region
    $region2: #{tpu_custom_call.1} parent=1 // pred_check
      _
    $region3: #{tpu_custom_call.1} parent=1 // pred_check_branch
      %12 = sbr.rel (0) target = $region5
    $region4: #{tpu_custom_call.1} parent=1 // pred_region
      %s14 = ssub.s32 128, 128
      %15 = vsyncadd [#allocation3], %s14
      %s17 = sshll.u32 [#allocation2], 4
      %s18 = int_to_ptr.vmem [resolvable:$true] %s17
      %20 = dma.hbm_to_vmem [thread:$0]  %s0, 128, %s18, [#allocation3]
    $region5: #{tpu_custom_call.1} parent=1 // pred_fallthru
      _
    // Predicated region
    $region6: #{tpu_custom_call.1} parent=1 // pred_check
      _
    $region7: #{tpu_custom_call.1} parent=1 // pred_check_branch
      %22 = sbr.rel (0) target = $region9
    $region8: #{tpu_custom_call.1} parent=1 // pred_region
      %s24 = ssub.s32 4096, 4096
      %25 = vsyncadd [#allocation6], %s24
      %s26 = sshll.u32 [#allocation5], 4
      %s27 = int_to_ptr.vmem [resolvable:$true] %s26
      %32 = dma.hbm_to_vmem [thread:$0]  %s1, 4096, %s27, [#allocation6], 1024, 1024, 64
    $region9: #{tpu_custom_call.1} parent=1 // pred_fallthru
      _
    // Predicated region
    $region10: #{tpu_custom_call.1} parent=1 // pred_check
      _
    $region11: #{tpu_custom_call.1} parent=1 // pred_check_branch
      %34 = sbr.rel (0) target = $region13
    $region12: #{tpu_custom_call.1} parent=1 // pred_region
      %s36 = ssub.s32 128, 128
      %37 = vsyncadd [#allocation6], %s36
      %s39 = sshll.u32 [#allocation7], 4
      %s40 = int_to_ptr.vmem [resolvable:$true] %s39
      %42 = dma.hbm_to_vmem [thread:$0]  %s2, 128, %s40, [#allocation6]
    $region13: #{tpu_custom_call.1} parent=1 // pred_fallthru
      _
    // Predicated region
    $region14: #{tpu_custom_call.1} parent=1 // pred_check
      _
    $region15: #{tpu_custom_call.1} parent=1 // pred_check_branch
      %44 = sbr.rel (0) target = $region17
    $region16: #{tpu_custom_call.1} parent=1 // pred_region
      %45 = dma.done [#allocation3], 128
    $region17: #{tpu_custom_call.1} parent=1 // pred_fallthru
      _
    // Predicated region
    $region18: #{tpu_custom_call.1} parent=1 // pred_check
      _
    $region19: #{tpu_custom_call.1} parent=1 // pred_check_branch
      %47 = sbr.rel (0) target = $region21
    $region20: #{tpu_custom_call.1} parent=1 // pred_region
      %48 = dma.done [#allocation6], 4096
    $region21: #{tpu_custom_call.1} parent=1 // pred_fallthru
      _
    // Predicated region
    $region22: #{tpu_custom_call.1} parent=1 // pred_check
      _
    $region23: #{tpu_custom_call.1} parent=1 // pred_check_branch
      %50 = sbr.rel (0) target = $region25
    $region24: #{tpu_custom_call.1} parent=1 // pred_region
      %51 = dma.done [#allocation6], 128
    $region25: #{tpu_custom_call.1} parent=1 // pred_fallthru
      _
    %v52 = vld [vmem:[#allocation2] sm:$0xff]
    %v53 = vld [vmem:[#allocation5] sm:$0xff]
    %v54 = vld [vmem:[#allocation5 + $0x8] sm:$0xff]
    %v55 = vld [vmem:[#allocation5 + $0x10] sm:$0xff]
    %v56 = vld [vmem:[#allocation5 + $0x18] sm:$0xff]
    %v57 = vld [vmem:[#allocation5 + $0x20] sm:$0xff]
    %v58 = vld [vmem:[#allocation5 + $0x28] sm:$0xff]
    %v59 = vld [vmem:[#allocation5 + $0x30] sm:$0xff]
    %v60 = vld [vmem:[#allocation5 + $0x38] sm:$0xff]
    %v61 = vld [vmem:[#allocation5 + $0x40] sm:$0xff]
    %v62 = vld [vmem:[#allocation5 + $0x48] sm:$0xff]
    %v63 = vld [vmem:[#allocation5 + $0x50] sm:$0xff]
    %v64 = vld [vmem:[#allocation5 + $0x58] sm:$0xff]
    %v65 = vld [vmem:[#allocation5 + $0x60] sm:$0xff]
    %v66 = vld [vmem:[#allocation5 + $0x68] sm:$0xff]
    %v67 = vld [vmem:[#allocation5 + $0x70] sm:$0xff]
    %v68 = vld [vmem:[#allocation5 + $0x78] sm:$0xff]
    %v69 = vld [vmem:[#allocation5 + $0x80] sm:$0xff]
    %v70 = vld [vmem:[#allocation5 + $0x88] sm:$0xff]
    %v71 = vld [vmem:[#allocation5 + $0x90] sm:$0xff]
    %v72 = vld [vmem:[#allocation5 + $0x98] sm:$0xff]
    %v73 = vld [vmem:[#allocation5 + $0xa0] sm:$0xff]
    %v74 = vld [vmem:[#allocation5 + $0xa8] sm:$0xff]
    %v75 = vld [vmem:[#allocation5 + $0xb0] sm:$0xff]
    %v76 = vld [vmem:[#allocation5 + $0xb8] sm:$0xff]
    %v77 = vld [vmem:[#allocation5 + $0xc0] sm:$0xff]
    %v78 = vld [vmem:[#allocation5 + $0xc8] sm:$0xff]
    %v79 = vld [vmem:[#allocation5 + $0xd0] sm:$0xff]
    %v80 = vld [vmem:[#allocation5 + $0xd8] sm:$0xff]
    %v81 = vld [vmem:[#allocation5 + $0xe0] sm:$0xff]
    %v82 = vld [vmem:[#allocation5 + $0xe8] sm:$0xff]
    %v83 = vld [vmem:[#allocation5 + $0xf0] sm:$0xff]
    %v84 = vld [vmem:[#allocation5 + $0xf8] sm:$0xff]
    %v85 = vld [vmem:[#allocation7] sm:$0xff]
    %v87 = vlaneseq
    %v88 = vshrl.u32 %v87, 7
    %v89 = vsub.s32 0, %v88
    %v90 = vrot.slane %v85, %v89
    %v91 = vlaneseq
    %v92 = vshrl.u32 %v91, 7
    %v93 = vsub.s32 1, %v92
    %v94 = vrot.slane %v85, %v93
    %v95 = vlaneseq
    %v96 = vshrl.u32 %v95, 7
    %v97 = vsub.s32 2, %v96
    %v98 = vrot.slane %v85, %v97
    %v99 = vlaneseq
    %v100 = vshrl.u32 %v99, 7
    %v101 = vsub.s32 3, %v100
    %v102 = vrot.slane %v85, %v101
    %v103 = vlaneseq
    %v104 = vshrl.u32 %v103, 7
    %v105 = vsub.s32 4, %v104
    %v106 = vrot.slane %v85, %v105
    %v107 = vlaneseq
    %v108 = vshrl.u32 %v107, 7
    %v109 = vsub.s32 5, %v108
    %v110 = vrot.slane %v85, %v109
    %v111 = vlaneseq
    %v112 = vshrl.u32 %v111, 7
    %v113 = vsub.s32 6, %v112
    %v114 = vrot.slane %v85, %v113
    %v115 = vlaneseq
    %v116 = vshrl.u32 %v115, 7
    %v117 = vsub.s32 7, %v116
    %v118 = vrot.slane %v85, %v117
    %vm127 = vcmask 261120
    %v129 = vsel %vm127, %v52, 0
    %131 = vmatprep.subr.mxu0 %v54
    %132 = vmatpush1.msra.mxu0 %v53
    %133 = vmatprep.subr.mxu0 %v62
    %134 = vmatpush1.msra.mxu0 %v61
    %135 = vmatprep.subr.mxu0 %v70
    %136 = vmatpush1.msra.mxu0 %v69
    %137 = vmatprep.subr.mxu0 %v78
    %138 = vmatpush1.msra.mxu0 %v77
    %139 = vmatprep.subr.mxu0 0.0
    %140 = vmatpush1.msra.mxu0 0.0
    %141 = vmatprep.subr.mxu0 0.0
    %142 = vmatpush1.msra.mxu0 0.0
    %143 = vmatprep.subr.mxu0 0.0
    %144 = vmatpush1.msra.mxu0 0.0
    %145 = vmatprep.subr.mxu0 0.0
    %146 = vmatpush1.msra.mxu0 0.0
    %147 = vmatprep.subr.mxu0 0.0
    %148 = vmatpush1.msra.mxu0 0.0
    %149 = vmatprep.subr.mxu0 0.0
    %150 = vmatpush1.msra.mxu0 0.0
    %151 = vmatprep.subr.mxu0 0.0
    %152 = vmatpush1.msra.mxu0 0.0
    %153 = vmatprep.subr.mxu0 0.0
    %154 = vmatpush1.msra.mxu0 0.0
    %155 = vmatprep.subr.mxu0 0.0
    %156 = vmatpush1.msra.mxu0 0.0
    %157 = vmatprep.subr.mxu0 0.0
    %158 = vmatpush1.msra.mxu0 0.0
    %159 = vmatprep.subr.mxu0 0.0
    %160 = vmatpush1.msra.mxu0 0.0
    %161 = vmatprep.subr.mxu0 0.0
    %162 = vmatpush1.msra.mxu0 0.0
    %163 = vmatprep.subr.mxu0 0.0
    %164 = vmatpush1.msra.mxu0 0.0
    %165 = vmatprep.subr.mxu0 0.0
    %166 = vmatpush1.msra.mxu0 0.0
    %167 = vmatprep.subr.mxu0 0.0
    %168 = vmatpush1.msra.mxu0 0.0
    %169 = vmatprep.subr.mxu0 0.0
    %170 = vmatpush1.msra.mxu0 0.0
    %171 = vmatprep.subr.mxu0 0.0
    %172 = vmatpush1.msra.mxu0 0.0
    %173 = vmatprep.subr.mxu0 0.0
    %174 = vmatpush1.msra.mxu0 0.0
    %175 = vmatprep.subr.mxu0 0.0
    %176 = vmatpush1.msra.mxu0 0.0
    %177 = vmatprep.subr.mxu0 0.0
    %178 = vmatpush1.msra.mxu0 0.0
    %179 = vmatprep.subr.mxu0 0.0
    %180 = vmatpush1.msra.mxu0 0.0
    %181 = vmatprep.subr.mxu0 0.0
    %182 = vmatpush1.msra.mxu0 0.0
    %183 = vmatprep.subr.mxu0 0.0
    %184 = vmatpush1.msra.mxu0 0.0
    %185 = vmatprep.subr.mxu0 0.0
    %186 = vmatpush1.msra.mxu0 0.0
    %187 = vmatprep.subr.mxu0 0.0
    %188 = vmatpush1.msra.mxu0 0.0
    %189 = vmatprep.subr.mxu0 0.0
    %190 = vmatpush1.msra.mxu0 0.0
    %191 = vmatprep.subr.mxu0 0.0
    %192 = vmatpush1.msra.mxu0 0.0
    %193 = vmatprep.subr.mxu0 0.0
    %194 = vmatpush1.msra.mxu0 0.0
    %195 = vmatprep.mubr.f32.mxu0 0.0
    %196 = vmatmul.mubr.f32.gmra.mrb[0].mxu0 %v129
    %v197 = vpop.f32.mrb[0].mxu0
    %v198 = vadd.f32 %v90, %v197
    %v199 = vpop.f32.mrb[0].mxu0
    %v200 = vadd.f32 %v94, %v199
    %201 = vdwg.mxu0
    %202 = vmatprep.subr.mxu0 %v56
    %203 = vmatpush1.msra.mxu0 %v55
    %204 = vmatprep.subr.mxu0 %v64
    %205 = vmatpush1.msra.mxu0 %v63
    %206 = vmatprep.subr.mxu0 %v72
    %207 = vmatpush1.msra.mxu0 %v71
    %208 = vmatprep.subr.mxu0 %v80
    %209 = vmatpush1.msra.mxu0 %v79
    %210 = vmatprep.subr.mxu0 0.0
    %211 = vmatpush1.msra.mxu0 0.0
    %212 = vmatprep.subr.mxu0 0.0
    %213 = vmatpush1.msra.mxu0 0.0
    %214 = vmatprep.subr.mxu0 0.0
    %215 = vmatpush1.msra.mxu0 0.0
    %216 = vmatprep.subr.mxu0 0.0
    %217 = vmatpush1.msra.mxu0 0.0
    %218 = vmatprep.subr.mxu0 0.0
    %219 = vmatpush1.msra.mxu0 0.0
    %220 = vmatprep.subr.mxu0 0.0
    %221 = vmatpush1.msra.mxu0 0.0
    %222 = vmatprep.subr.mxu0 0.0
    %223 = vmatpush1.msra.mxu0 0.0
    %224 = vmatprep.subr.mxu0 0.0
    %225 = vmatpush1.msra.mxu0 0.0
    %226 = vmatprep.subr.mxu0 0.0
    %227 = vmatpush1.msra.mxu0 0.0
    %228 = vmatprep.subr.mxu0 0.0
    %229 = vmatpush1.msra.mxu0 0.0
    %230 = vmatprep.subr.mxu0 0.0
    %231 = vmatpush1.msra.mxu0 0.0
    %232 = vmatprep.subr.mxu0 0.0
    %233 = vmatpush1.msra.mxu0 0.0
    %234 = vmatprep.subr.mxu0 0.0
    %235 = vmatpush1.msra.mxu0 0.0
    %236 = vmatprep.subr.mxu0 0.0
    %237 = vmatpush1.msra.mxu0 0.0
    %238 = vmatprep.subr.mxu0 0.0
    %239 = vmatpush1.msra.mxu0 0.0
    %240 = vmatprep.subr.mxu0 0.0
    %241 = vmatpush1.msra.mxu0 0.0
    %242 = vmatprep.subr.mxu0 0.0
    %243 = vmatpush1.msra.mxu0 0.0
    %244 = vmatprep.subr.mxu0 0.0
    %245 = vmatpush1.msra.mxu0 0.0
    %246 = vmatprep.subr.mxu0 0.0
    %247 = vmatpush1.msra.mxu0 0.0
    %248 = vmatprep.subr.mxu0 0.0
    %249 = vmatpush1.msra.mxu0 0.0
    %250 = vmatprep.subr.mxu0 0.0
    %251 = vmatpush1.msra.mxu0 0.0
    %252 = vmatprep.subr.mxu0 0.0
    %253 = vmatpush1.msra.mxu0 0.0
    %254 = vmatprep.subr.mxu0 0.0
    %255 = vmatpush1.msra.mxu0 0.0
    %256 = vmatprep.subr.mxu0 0.0
    %257 = vmatpush1.msra.mxu0 0.0
    %258 = vmatprep.subr.mxu0 0.0
    %259 = vmatpush1.msra.mxu0 0.0
    %260 = vmatprep.subr.mxu0 0.0
    %261 = vmatpush1.msra.mxu0 0.0
    %262 = vmatprep.subr.mxu0 0.0
    %263 = vmatpush1.msra.mxu0 0.0
    %264 = vmatprep.subr.mxu0 0.0
    %265 = vmatpush1.msra.mxu0 0.0
    %266 = vmatprep.mubr.f32.mxu0 0.0
    %267 = vmatmul.mubr.f32.gmra.mrb[0].mxu0 %v129
    %v268 = vpop.f32.mrb[0].mxu0
    %v269 = vadd.f32 %v98, %v268
    %v270 = vpop.f32.mrb[0].mxu0
    %v271 = vadd.f32 %v102, %v270
    %272 = vdwg.mxu0
    %273 = vmatprep.subr.mxu0 %v58
    %274 = vmatpush1.msra.mxu0 %v57
    %275 = vmatprep.subr.mxu0 %v66
    %276 = vmatpush1.msra.mxu0 %v65
    %277 = vmatprep.subr.mxu0 %v74
    %278 = vmatpush1.msra.mxu0 %v73
    %279 = vmatprep.subr.mxu0 %v82
    %280 = vmatpush1.msra.mxu0 %v81
    %281 = vmatprep.subr.mxu0 0.0
    %282 = vmatpush1.msra.mxu0 0.0
    %283 = vmatprep.subr.mxu0 0.0
    %284 = vmatpush1.msra.mxu0 0.0
    %285 = vmatprep.subr.mxu0 0.0
    %286 = vmatpush1.msra.mxu0 0.0
    %287 = vmatprep.subr.mxu0 0.0
    %288 = vmatpush1.msra.mxu0 0.0
    %289 = vmatprep.subr.mxu0 0.0
    %290 = vmatpush1.msra.mxu0 0.0
    %291 = vmatprep.subr.mxu0 0.0
    %292 = vmatpush1.msra.mxu0 0.0
    %293 = vmatprep.subr.mxu0 0.0
    %294 = vmatpush1.msra.mxu0 0.0
    %295 = vmatprep.subr.mxu0 0.0
    %296 = vmatpush1.msra.mxu0 0.0
    %297 = vmatprep.subr.mxu0 0.0
    %298 = vmatpush1.msra.mxu0 0.0
    %299 = vmatprep.subr.mxu0 0.0
    %300 = vmatpush1.msra.mxu0 0.0
    %301 = vmatprep.subr.mxu0 0.0
    %302 = vmatpush1.msra.mxu0 0.0
    %303 = vmatprep.subr.mxu0 0.0
    %304 = vmatpush1.msra.mxu0 0.0
    %305 = vmatprep.subr.mxu0 0.0
    %306 = vmatpush1.msra.mxu0 0.0
    %307 = vmatprep.subr.mxu0 0.0
    %308 = vmatpush1.msra.mxu0 0.0
    %309 = vmatprep.subr.mxu0 0.0
    %310 = vmatpush1.msra.mxu0 0.0
    %311 = vmatprep.subr.mxu0 0.0
    %312 = vmatpush1.msra.mxu0 0.0
    %313 = vmatprep.subr.mxu0 0.0
    %314 = vmatpush1.msra.mxu0 0.0
    %315 = vmatprep.subr.mxu0 0.0
    %316 = vmatpush1.msra.mxu0 0.0
    %317 = vmatprep.subr.mxu0 0.0
    %318 = vmatpush1.msra.mxu0 0.0
    %319 = vmatprep.subr.mxu0 0.0
    %320 = vmatpush1.msra.mxu0 0.0
    %321 = vmatprep.subr.mxu0 0.0
    %322 = vmatpush1.msra.mxu0 0.0
    %323 = vmatprep.subr.mxu0 0.0
    %324 = vmatpush1.msra.mxu0 0.0
    %325 = vmatprep.subr.mxu0 0.0
    %326 = vmatpush1.msra.mxu0 0.0
    %327 = vmatprep.subr.mxu0 0.0
    %328 = vmatpush1.msra.mxu0 0.0
    %329 = vmatprep.subr.mxu0 0.0
    %330 = vmatpush1.msra.mxu0 0.0
    %331 = vmatprep.subr.mxu0 0.0
    %332 = vmatpush1.msra.mxu0 0.0
    %333 = vmatprep.subr.mxu0 0.0
    %334 = vmatpush1.msra.mxu0 0.0
    %335 = vmatprep.subr.mxu0 0.0
    %336 = vmatpush1.msra.mxu0 0.0
    %337 = vmatprep.mubr.f32.mxu0 0.0
    %338 = vmatmul.mubr.f32.gmra.mrb[0].mxu0 %v129
    %v339 = vpop.f32.mrb[0].mxu0
    %v340 = vadd.f32 %v106, %v339
    %v341 = vpop.f32.mrb[0].mxu0
    %v342 = vadd.f32 %v110, %v341
    %343 = vdwg.mxu0
    %344 = vmatprep.subr.mxu0 %v60
    %345 = vmatpush1.msra.mxu0 %v59
    %346 = vmatprep.subr.mxu0 %v68
    %347 = vmatpush1.msra.mxu0 %v67
    %348 = vmatprep.subr.mxu0 %v76
    %349 = vmatpush1.msra.mxu0 %v75
    %350 = vmatprep.subr.mxu0 %v84
    %351 = vmatpush1.msra.mxu0 %v83
    %352 = vmatprep.subr.mxu0 0.0
    %353 = vmatpush1.msra.mxu0 0.0
    %354 = vmatprep.subr.mxu0 0.0
    %355 = vmatpush1.msra.mxu0 0.0
    %356 = vmatprep.subr.mxu0 0.0
    %357 = vmatpush1.msra.mxu0 0.0
    %358 = vmatprep.subr.mxu0 0.0
    %359 = vmatpush1.msra.mxu0 0.0
    %360 = vmatprep.subr.mxu0 0.0
    %361 = vmatpush1.msra.mxu0 0.0
    %362 = vmatprep.subr.mxu0 0.0
    %363 = vmatpush1.msra.mxu0 0.0
    %364 = vmatprep.subr.mxu0 0.0
    %365 = vmatpush1.msra.mxu0 0.0
    %366 = vmatprep.subr.mxu0 0.0
    %367 = vmatpush1.msra.mxu0 0.0
    %368 = vmatprep.subr.mxu0 0.0
    %369 = vmatpush1.msra.mxu0 0.0
    %370 = vmatprep.subr.mxu0 0.0
    %371 = vmatpush1.msra.mxu0 0.0
    %372 = vmatprep.subr.mxu0 0.0
    %373 = vmatpush1.msra.mxu0 0.0
    %374 = vmatprep.subr.mxu0 0.0
    %375 = vmatpush1.msra.mxu0 0.0
    %376 = vmatprep.subr.mxu0 0.0
    %377 = vmatpush1.msra.mxu0 0.0
    %378 = vmatprep.subr.mxu0 0.0
    %379 = vmatpush1.msra.mxu0 0.0
    %380 = vmatprep.subr.mxu0 0.0
    %381 = vmatpush1.msra.mxu0 0.0
    %382 = vmatprep.subr.mxu0 0.0
    %383 = vmatpush1.msra.mxu0 0.0
    %384 = vmatprep.subr.mxu0 0.0
    %385 = vmatpush1.msra.mxu0 0.0
    %386 = vmatprep.subr.mxu0 0.0
    %387 = vmatpush1.msra.mxu0 0.0
    %388 = vmatprep.subr.mxu0 0.0
    %389 = vmatpush1.msra.mxu0 0.0
    %390 = vmatprep.subr.mxu0 0.0
    %391 = vmatpush1.msra.mxu0 0.0
    %392 = vmatprep.subr.mxu0 0.0
    %393 = vmatpush1.msra.mxu0 0.0
    %394 = vmatprep.subr.mxu0 0.0
    %395 = vmatpush1.msra.mxu0 0.0
    %396 = vmatprep.subr.mxu0 0.0
    %397 = vmatpush1.msra.mxu0 0.0
    %398 = vmatprep.subr.mxu0 0.0
    %399 = vmatpush1.msra.mxu0 0.0
    %400 = vmatprep.subr.mxu0 0.0
    %401 = vmatpush1.msra.mxu0 0.0
    %402 = vmatprep.subr.mxu0 0.0
    %403 = vmatpush1.msra.mxu0 0.0
    %404 = vmatprep.subr.mxu0 0.0
    %405 = vmatpush1.msra.mxu0 0.0
    %406 = vmatprep.subr.mxu0 0.0
    %407 = vmatpush1.msra.mxu0 0.0
    %408 = vmatprep.mubr.f32.mxu0 0.0
    %409 = vmatmul.mubr.f32.gmra.mrb[0].mxu0 %v129
    %v410 = vpop.f32.mrb[0].mxu0
    %v411 = vadd.f32 %v114, %v410
    %v412 = vpop.f32.mrb[0].mxu0
    %v413 = vadd.f32 %v118, %v412
    %414 = vdwg.mxu0
    %415 = vst [vmem:[#allocation8] sm:$0xff] %v198
    %416 = vst [vmem:[#allocation8 + $0x8] sm:$0xff] %v200
    %417 = vst [vmem:[#allocation8 + $0x10] sm:$0xff] %v269
    %418 = vst [vmem:[#allocation8 + $0x18] sm:$0xff] %v271
    %419 = vst [vmem:[#allocation8 + $0x20] sm:$0xff] %v340
    %420 = vst [vmem:[#allocation8 + $0x28] sm:$0xff] %v342
    %421 = vst [vmem:[#allocation8 + $0x30] sm:$0xff] %v411
    %422 = vst [vmem:[#allocation8 + $0x38] sm:$0xff] %v413
    // Predicated region
    $region26: #{tpu_custom_call.1} parent=1 // pred_check
      _
    $region27: #{tpu_custom_call.1} parent=1 // pred_check_branch
      %424 = sbr.rel (0) target = $region29
    $region28: #{tpu_custom_call.1} parent=1 // pred_region
      %s426 = ssub.s32 1024, 1024
      %427 = vsyncadd [#allocation4], %s426
      %s429 = sshll.u32 [#allocation8], 4
      %s430 = int_to_ptr.vmem [resolvable:$true] %s429
      %432 = dma.vmem_to_hbm [thread:$0]  %s430, 1024, %s3, [#allocation4]
    $region29: #{tpu_custom_call.1} parent=1 // pred_fallthru
      _
    // Predicated region
    $region30: #{tpu_custom_call.1} parent=1 // pred_check
      _
    $region31: #{tpu_custom_call.1} parent=1 // pred_check_branch
      %434 = sbr.rel (0) target = $region33
    $region32: #{tpu_custom_call.1} parent=1 // pred_region
      %435 = dma.done [#allocation4], 1024
    $region33: #{tpu_custom_call.1} parent=1 // pred_fallthru
      _
    %436 = vsyncpa [#allocation3], 1
    %437 = vsyncpa [#allocation6], 1
    %438 = vsyncpa [#allocation4], 1

</llo_original>
